<compile_context>
chip_gen: v7x
topology: tpu7x:2x2x1
jax: 0.10.0
libtpu: 0.0.40
codegen_flags: <defaults>
</compile_context>

<pallas_src>
import math
import functools
import numpy as np

import jax
import jax.numpy as jnp
from jax.experimental import pallas as pl
from jax.experimental.pallas import tpu as pltpu


TILE_B_MAX = 256  # amortizes ~0.35us/grid-step on v5e/v6e, stays small on v7x (64 MiB VMEM/TC)


# ----------------------------------------------------------------------------------
# Diffusion schedule buffers (host-side numpy float64 -> float32, matching torch)
# ----------------------------------------------------------------------------------
def sigmoid_beta_schedule(timesteps, start=-3.0, end=3.0, tau=1.0):
    steps = timesteps + 1
    t = np.linspace(0, timesteps, steps, dtype=np.float64) / timesteps
    sigmoid = lambda z: 1.0 / (1.0 + np.exp(-z))
    v_start = sigmoid(start / tau)
    v_end = sigmoid(end / tau)
    alphas_cumprod = (-sigmoid((t * (end - start) + start) / tau) + v_end) / (v_end - v_start)
    alphas_cumprod = alphas_cumprod / alphas_cumprod[0]
    betas = 1.0 - (alphas_cumprod[1:] / alphas_cumprod[:-1])
    return np.clip(betas, 0.0, 0.999)


def build_schedule(timesteps):
    betas = sigmoid_beta_schedule(timesteps)
    alphas = 1.0 - betas
    ac = np.cumprod(alphas, axis=0)
    sqrt_ac = np.sqrt(ac)
    sqrt_1mac = np.sqrt(1.0 - ac)
    snr = ac / (1.0 - ac)
    loss_weight = snr / (snr + 1.0)           # objective == 'pred_v', no min-SNR clip
    return dict(
        sqrt_alphas_cumprod=jnp.asarray(sqrt_ac, jnp.float32),
        sqrt_one_minus_alphas_cumprod=jnp.asarray(sqrt_1mac, jnp.float32),
        loss_weight=jnp.asarray(loss_weight, jnp.float32),
        num_timesteps=timesteps,
    )


def sinusoidal_time_emb(t, dim):
    half = dim // 2
    scale = math.log(10000.0) / (half - 1)
    freqs = jnp.exp(jnp.arange(half, dtype=jnp.float32) * -scale)
    ang = t.astype(jnp.float32)[:, None] * freqs[None, :]
    return jnp.concatenate([jnp.sin(ang), jnp.cos(ang)], axis=-1)   # (B, dim)


def _round_up(n, m):
    return ((n + m - 1) // m) * m


def _pad2d(a, rows, cols, dtype):
    out = jnp.zeros((rows, cols), dtype)
    return out.at[:a.shape[0], :a.shape[1]].set(a.astype(dtype))


def _choose_tile_b(B, tile_b_max=TILE_B_MAX):
    # 16 = bf16 sublane pack; don't pad tiny batches all the way to 128/256 rows.
    tb = _round_up(max(B, 1), 16)
    if B >= 32:
        # Prefer >= 2 batch tiles so dimension_semantics=("parallel",) can shard the
        # grid across both v7x TensorCores (second TC would otherwise sit idle).
        tb = min(tb, _round_up(-(-B // 2), 16))
    return min(tile_b_max, tb)


# ----------------------------------------------------------------------------------
# Fused Pallas kernel: encoder + q_sample + MLP denoiser + v-target + weighted loss
# ----------------------------------------------------------------------------------
def _fused_loss_kernel(img_ref, noise_ref, tbias_ref, coef_ref,
                       wenc_ref, benc_ref, w1x_ref, w2_ref, b2_ref,
                       out_ref, *, inv_v):
    # packed per-row scalars (8 lanes, 3 used): 0=sqrt_ac[t], 1=sqrt_1mac[t], 2=loss_weight[t]
    coef = coef_ref[...]                                                   # (TB, 8) f32
    sac = coef[:, 0:1]                                                     # (TB, 1)
    som = coef[:, 1:2]
    lw = coef[:, 2:3]                                                      # 0 on padded rows

    # Encoder matmul. The (2x - 1) normalization is folded into wenc/benc on the host,
    # so the bf16 image goes straight into the MXU (no wide VPU pass; v5e has no bf16 VALU).
    z = jnp.dot(img_ref[...], wenc_ref[...],
                preferred_element_type=jnp.float32) + benc_ref[...]        # (TB, V) f32

    noise = noise_ref[...].astype(jnp.float32)                             # (TB, V) f32

    # Hoist the lane broadcasts once and reuse (JAX does not CSE broadcast_in_dim).
    sac_b = jnp.broadcast_to(sac, z.shape)
    som_b = jnp.broadcast_to(som, z.shape)

    # pred_v target computed early so z/noise live ranges end before the denoiser.
    v = sac_b * noise - som_b * z                                          # (TB, V)
    # q_sample
    x_t = sac_b * z + som_b * noise                                        # (TB, V)

    # MLP denoiser: out = silu(x_t @ W1x + (temb @ W1t + b1)) @ W2 + b2
    h = jnp.dot(x_t.astype(jnp.bfloat16), w1x_ref[...],
                preferred_element_type=jnp.float32) + tbias_ref[...].astype(jnp.float32)
    h = h * jax.nn.sigmoid(h)                                              # SiLU (EUP)
    model_out = jnp.dot(h.astype(jnp.bfloat16), w2_ref[...],
                        preferred_element_type=jnp.float32) + b2_ref[...]  # (TB, V) f32

    # Weighted per-row MSE over the true V features (padded lanes are exact zeros),
    # reduced to one per-tile partial sum -> tiny lane-dense writeback.
    err = model_out - v
    per_row = jnp.sum(err * err, axis=-1, keepdims=True) * inv_v           # (TB, 1)
    tile_sum = jnp.sum(per_row * lw, axis=0, keepdims=True)                # (1, 1); lw==0 on pad
    out_ref[...] = jnp.broadcast_to(tile_sum, out_ref.shape)               # (8, 128) block


def fused_diffusion_loss(img_flat, params, noise, tbias, sac, som, lw, *, tile_b_max=TILE_B_MAX):
    B, F = img_flat.shape
    V = noise.shape[1]
    H = tbias.shape[1]

    tile_b = _choose_tile_b(B, tile_b_max)
    B_pad = _round_up(max(B, 1), tile_b)
    F_pad = _round_up(F, 128)
    V_pad = _round_up(V, 128)
    H_pad = _round_up(H, 128)
    num_tiles = B_pad // tile_b

    # Streamed activations as bf16 (halves HBM traffic; accumulation stays f32 in-kernel).
    img_p = _pad2d(img_flat, B_pad, F_pad, jnp.bfloat16)
    noise_p = _pad2d(noise, B_pad, V_pad, jnp.bfloat16)
    tbias_p = _pad2d(tbias, B_pad, H_pad, jnp.bfloat16)

    # Per-row scalars packed into 8 lanes (block (tile_b, 8) is legal: equals full last dim).
    coef_small = jnp.stack([sac, som, lw], axis=-1).astype(jnp.float32)    # (B, 3)
    coef_p = jnp.zeros((B_pad, 8), jnp.float32).at[:B, :3].set(coef_small)

    # Fold normalize_to_neg_one_to_one into the encoder weights:
    #   (2x - 1) @ W + b  ==  x @ (2W) + (b - colsum(W))
    wenc_folded = 2.0 * params["w_enc"]
    benc_folded = params["b_enc"] - jnp.sum(params["w_enc"], axis=0, keepdims=True)

    # Weights: bf16 into the MXU, biases stay f32 (added post-accumulation).
    wenc_p = _pad2d(wenc_folded, F_pad, V_pad, jnp.bfloat16)
    benc_p = _pad2d(benc_folded, 1, V_pad, jnp.float32)
    w1x_p = _pad2d(params["w1x"], V_pad, H_pad, jnp.bfloat16)
    w2_p = _pad2d(params["w2"], H_pad, V_pad, jnp.bfloat16)
    b2_p = _pad2d(params["b2"], 1, V_pad, jnp.float32)

    def row_spec(cols):
        return pl.BlockSpec((tile_b, cols), lambda i: (i, 0))

    def resident_spec(rows, cols):
        # Constant index_map -> weights stay VMEM-resident across the batch grid.
        # TODO(synk): pipeline_mode=pl.Buffered(1) would single-buffer these on v7x
        # (halves resident VMEM for large encoders); left at the portable default here.
        return pl.BlockSpec((rows, cols), lambda i: (0, 0))

    operands = (img_p, noise_p, tbias_p, coef_p, wenc_p, benc_p, w1x_p, w2_p, b2_p)

    flops = 2 * B_pad * (F_pad * V_pad + 2 * V_pad * H_pad) + 10 * B_pad * V_pad
    transcendentals = B_pad * H_pad
    bytes_accessed = (sum(int(a.size) * a.dtype.itemsize for a in operands)
                      + num_tiles * 8 * 128 * 4)

    # Re-derive the VMEM budget from actual tile/weight sizes (double-buffered operands
    # + headroom for f32 intermediates), capped under v7x's 64 MiB/TC physical VMEM.
    act_bytes = tile_b * (2 * F_pad + 2 * V_pad + 2 * H_pad + 8 * 4)
    wt_bytes = 2 * (F_pad * V_pad + 2 * V_pad * H_pad) + 2 * V_pad * 4
    need = 2 * (act_bytes + wt_bytes) + 2 * (8 * 128 * 4)
    vmem_limit = int(min(max(4 * need, 16 * 1024 * 1024), 48 * 1024 * 1024))

    out = pl.pallas_call(
        functools.partial(_fused_loss_kernel, inv_v=1.0 / float(V)),
        out_shape=jax.ShapeDtypeStruct((num_tiles * 8, 128), jnp.float32),
        grid=(num_tiles,),
        in_specs=[
            row_spec(F_pad),                               # img (bf16)
            row_spec(V_pad),                               # noise (bf16)
            row_spec(H_pad),                               # tbias = temb @ W1t + b1 (bf16)
            pl.BlockSpec((tile_b, 8), lambda i: (i, 0)),   # packed sac / som / lw (f32)
            resident_spec(F_pad, V_pad),                   # folded encoder weight
            resident_spec(1, V_pad),                       # folded encoder bias
            resident_spec(V_pad, H_pad),                   # W1x
            resident_spec(H_pad, V_pad),                   # W2
            resident_spec(1, V_pad),                       # b2
        ],
        out_specs=pl.BlockSpec((8, 128), lambda i: (i, 0)),
        compiler_params=pltpu.CompilerParams(
            dimension_semantics=("parallel",),             # batch tiles shard across v7x TCs
            vmem_limit_bytes=vmem_limit),
        cost_estimate=pl.CostEstimate(
            flops=int(flops),
            transcendentals=int(transcendentals),
            bytes_accessed=int(bytes_accessed)),
    )(*operands)

    # One partial sum per tile (broadcast across its (8,128) block); padded rows contribute 0.
    return jnp.sum(out[0::8, 0]) / B


# ----------------------------------------------------------------------------------
# Module wrapper (glue in plain JAX: RNG, gathers, time embedding, weight folding)
# ----------------------------------------------------------------------------------
def init_params(key, in_features, vector_size, hidden_dim, time_emb_dim):
    ks = jax.random.split(key, 4)

    def lin(k, fi, fo):
        return jax.random.normal(k, (fi, fo), jnp.float32) / math.sqrt(fi)

    return dict(
        w_enc=lin(ks[0], in_features, vector_size),
        b_enc=jnp.zeros((1, vector_size), jnp.float32),
        w1x=lin(ks[1], vector_size, hidden_dim),
        w1t=lin(ks[2], time_emb_dim, hidden_dim),
        b1=jnp.zeros((1, hidden_dim), jnp.float32),
        w2=lin(ks[3], hidden_dim, vector_size),
        b2=jnp.zeros((1, vector_size), jnp.float32),
    )


def gaussian_diffusion_mlp_encoder_forward(x, params, schedule, key,
                                           vector_size, time_emb_dim):
    B = x.shape[0]
    k_t, k_noise = jax.random.split(key)
    t = jax.random.randint(k_t, (B,), 0, schedule["num_timesteps"])        # torch.randint
    noise = jax.random.normal(k_noise, (B, vector_size), jnp.float32)      # torch.randn_like

    img_flat = x.reshape(B, -1).astype(jnp.float32)                        # NCHW flatten
    temb = sinusoidal_time_emb(t, time_emb_dim)                            # (B, E)
    # Fold the tiny K=32 time-embedding matmul + b1 out of the kernel (bad MXU shape).
    tbias = jnp.dot(temb, params["w1t"]) + params["b1"]                    # (B, H)

    # extract(buffer, t, shape) -> per-batch scalars
    sac = schedule["sqrt_alphas_cumprod"][t]
    som = schedule["sqrt_one_minus_alphas_cumprod"][t]
    lw = schedule["loss_weight"][t]

    return fused_diffusion_loss(img_flat, params, noise, tbias, sac, som, lw)


def reference_forward(x, params, noise, temb, sac, som, lw):
    B = x.shape[0]
    hp = jax.lax.Precision.HIGHEST
    img = x.reshape(B, -1).astype(jnp.float32) * 2.0 - 1.0
    z = jnp.dot(img, params["w_enc"], precision=hp) + params["b_enc"]
    sac = sac[:, None]
    som = som[:, None]
    x_t = sac * z + som * noise
    h = (jnp.dot(x_t, params["w1x"], precision=hp)
         + jnp.dot(temb, params["w1t"], precision=hp) + params["b1"])
    h = h * jax.nn.sigmoid(h)
    out = jnp.dot(h, params["w2"], precision=hp) + params["b2"]
    v = sac * noise - som * z
    loss = jnp.mean((out - v) ** 2, axis=-1) * lw
    return jnp.mean(loss)


if __name__ == "__main__":
    # Small shapes consistent with the module's forward.
    B, C, H, W = 2, 4, 16, 16
    VECTOR_SIZE = 64
    HIDDEN_DIM = 128
    TIME_EMB_DIM = 32
    TIMESTEPS = 1000

    root = jax.random.PRNGKey(0)
    k_x, k_params, k_fwd = jax.random.split(root, 3)

    x = jax.random.normal(k_x, (B, C, H, W), jnp.float32)                  # NCHW input
    params = init_params(k_params, C * H * W, VECTOR_SIZE, HIDDEN_DIM, TIME_EMB_DIM)
    schedule = build_schedule(TIMESTEPS)

    loss = gaussian_diffusion_mlp_encoder_forward(
        x, params, schedule, k_fwd, VECTOR_SIZE, TIME_EMB_DIM)
    loss = jax.block_until_ready(loss)

    # Cross-check against a pure-JAX f32 (HIGHEST) reference using the same glue values.
    # The kernel streams img/noise/tbias/weights in bf16 (f32 accumulation), so allow a
    # few percent of relative deviation.
    k_t, k_noise = jax.random.split(k_fwd)
    t = jax.random.randint(k_t, (B,), 0, TIMESTEPS)
    noise = jax.random.normal(k_noise, (B, VECTOR_SIZE), jnp.float32)
    temb = sinusoidal_time_emb(t, TIME_EMB_DIM)
    sac = schedule["sqrt_alphas_cumprod"][t]
    som = schedule["sqrt_one_minus_alphas_cumprod"][t]
    lw = schedule["loss_weight"][t]
    ref = jax.block_until_ready(reference_forward(x, params, noise, temb, sac, som, lw))

    assert jnp.isfinite(loss), "kernel produced non-finite loss"
    np_err = abs(float(loss) - float(ref))
    assert np_err <= 5e-2 * (1.0 + abs(float(ref))), f"mismatch: {loss} vs {ref}"

    print("KERNEL_OK")
</pallas_src>

<mosaic_0001>
module attributes {stable_mosaic.version = 11 : i64} {
  func.func @_fused_loss_kernel(%arg0: i32, %arg1: memref<16x1024xbf16, #tpu.memory_space<vmem>>, %arg2: memref<16x128xbf16, #tpu.memory_space<vmem>>, %arg3: memref<16x128xbf16, #tpu.memory_space<vmem>>, %arg4: memref<16x8xf32, #tpu.memory_space<vmem>>, %arg5: memref<1024x128xbf16, #tpu.memory_space<vmem>>, %arg6: memref<1x128xf32, #tpu.memory_space<vmem>>, %arg7: memref<128x128xbf16, #tpu.memory_space<vmem>>, %arg8: memref<128x128xbf16, #tpu.memory_space<vmem>>, %arg9: memref<1x128xf32, #tpu.memory_space<vmem>>, %arg10: memref<8x128xf32, #tpu.memory_space<vmem>>) attributes {dimension_semantics = [#tpu.dimension_semantics<parallel>], iteration_bounds = array<i64: 1>, scalar_prefetch = 0 : i64, scratch_operands = 0 : i64, tpu.core_type = #tpu.core_type<tc>, window_params = [{transform_indices = @transform_0, window_bounds = array<i64: 16, 1024>}, {transform_indices = @transform_1, window_bounds = array<i64: 16, 128>}, {transform_indices = @transform_2, window_bounds = array<i64: 16, 128>}, {transform_indices = @transform_3, window_bounds = array<i64: 16, 8>}, {pipeline_mode = #tpu.pipeline_mode<synchronous>, transform_indices = @transform_4, window_bounds = array<i64: 1024, 128>}, {pipeline_mode = #tpu.pipeline_mode<synchronous>, transform_indices = @transform_5, window_bounds = array<i64: 1, 128>}, {pipeline_mode = #tpu.pipeline_mode<synchronous>, transform_indices = @transform_6, window_bounds = array<i64: 128, 128>}, {pipeline_mode = #tpu.pipeline_mode<synchronous>, transform_indices = @transform_7, window_bounds = array<i64: 128, 128>}, {pipeline_mode = #tpu.pipeline_mode<synchronous>, transform_indices = @transform_8, window_bounds = array<i64: 1, 128>}, {transform_indices = @transform_9, window_bounds = array<i64: 8, 128>}]} {
    %c0 = arith.constant 0 : index
    %c0_0 = arith.constant 0 : index
    %0 = vector.load %arg4[%c0, %c0_0] : memref<16x8xf32, #tpu.memory_space<vmem>>, vector<16x8xf32>
    %1 = vector.extract_strided_slice %0 {offsets = [0, 0], sizes = [16, 1], strides = [1, 1]} : vector<16x8xf32> to vector<16x1xf32>
    %2 = vector.extract_strided_slice %0 {offsets = [0, 1], sizes = [16, 1], strides = [1, 1]} : vector<16x8xf32> to vector<16x1xf32>
    %3 = vector.extract_strided_slice %0 {offsets = [0, 2], sizes = [16, 1], strides = [1, 1]} : vector<16x8xf32> to vector<16x1xf32>
    %c0_1 = arith.constant 0 : index
    %c0_2 = arith.constant 0 : index
    %4 = vector.load %arg1[%c0_1, %c0_2] : memref<16x1024xbf16, #tpu.memory_space<vmem>>, vector<16x1024xbf16>
    %c0_3 = arith.constant 0 : index
    %c0_4 = arith.constant 0 : index
    %5 = vector.load %arg5[%c0_3, %c0_4] : memref<1024x128xbf16, #tpu.memory_space<vmem>>, vector<1024x128xbf16>
    %cst = arith.constant dense<0.000000e+00> : vector<16x128xf32>
    %6 = tpu.matmul %4, %5, %cst {dimension_numbers = #tpu.dot_dimension_numbers<[1], [0], [0], [1], [0, 0, 1, 1], [], []>} : vector<16x1024xbf16>, vector<1024x128xbf16>, vector<16x128xf32> -> vector<16x128xf32>
    %c0_5 = arith.constant 0 : index
    %c0_6 = arith.constant 0 : index
    %7 = vector.load %arg6[%c0_5, %c0_6] : memref<1x128xf32, #tpu.memory_space<vmem>>, vector<1x128xf32>
    %8 = vector.broadcast %7 : vector<1x128xf32> to vector<16x128xf32>
    %9 = arith.addf %6, %8 : vector<16x128xf32>
    %c0_7 = arith.constant 0 : index
    %c0_8 = arith.constant 0 : index
    %10 = vector.load %arg2[%c0_7, %c0_8] : memref<16x128xbf16, #tpu.memory_space<vmem>>, vector<16x128xbf16>
    %11 = arith.extf %10 : vector<16x128xbf16> to vector<16x128xf32>
    %12 = vector.shape_cast %1 : vector<16x1xf32> to vector<16x1xf32>
    %13 = vector.broadcast %12 : vector<16x1xf32> to vector<16x128xf32>
    %14 = vector.shape_cast %2 : vector<16x1xf32> to vector<16x1xf32>
    %15 = vector.broadcast %14 : vector<16x1xf32> to vector<16x128xf32>
    %16 = arith.mulf %13, %11 : vector<16x128xf32>
    %17 = arith.mulf %15, %9 : vector<16x128xf32>
    %18 = arith.subf %16, %17 : vector<16x128xf32>
    %19 = arith.mulf %13, %9 : vector<16x128xf32>
    %20 = arith.mulf %15, %11 : vector<16x128xf32>
    %21 = arith.addf %19, %20 : vector<16x128xf32>
    %22 = arith.truncf %21 : vector<16x128xf32> to vector<16x128xbf16>
    %c0_9 = arith.constant 0 : index
    %c0_10 = arith.constant 0 : index
    %23 = vector.load %arg7[%c0_9, %c0_10] : memref<128x128xbf16, #tpu.memory_space<vmem>>, vector<128x128xbf16>
    %cst_11 = arith.constant dense<0.000000e+00> : vector<16x128xf32>
    %24 = tpu.matmul %22, %23, %cst_11 {dimension_numbers = #tpu.dot_dimension_numbers<[1], [0], [0], [1], [0, 0, 1, 1], [], []>} : vector<16x128xbf16>, vector<128x128xbf16>, vector<16x128xf32> -> vector<16x128xf32>
    %c0_12 = arith.constant 0 : index
    %c0_13 = arith.constant 0 : index
    %25 = vector.load %arg3[%c0_12, %c0_13] : memref<16x128xbf16, #tpu.memory_space<vmem>>, vector<16x128xbf16>
    %26 = arith.extf %25 : vector<16x128xbf16> to vector<16x128xf32>
    %27 = arith.addf %24, %26 : vector<16x128xf32>
    %28 = arith.negf %27 : vector<16x128xf32>
    %29 = math.exp %28 : vector<16x128xf32>
    %cst_14 = arith.constant 1.000000e+00 : f32
    %30 = vector.broadcast %cst_14 : f32 to vector<16x128xf32>
    %31 = arith.addf %30, %29 : vector<16x128xf32>
    %32 = arith.divf %30, %31 : vector<16x128xf32>
    %33 = arith.mulf %27, %32 : vector<16x128xf32>
    %34 = arith.truncf %33 : vector<16x128xf32> to vector<16x128xbf16>
    %c0_15 = arith.constant 0 : index
    %c0_16 = arith.constant 0 : index
    %35 = vector.load %arg8[%c0_15, %c0_16] : memref<128x128xbf16, #tpu.memory_space<vmem>>, vector<128x128xbf16>
    %cst_17 = arith.constant dense<0.000000e+00> : vector<16x128xf32>
    %36 = tpu.matmul %34, %35, %cst_17 {dimension_numbers = #tpu.dot_dimension_numbers<[1], [0], [0], [1], [0, 0, 1, 1], [], []>} : vector<16x128xbf16>, vector<128x128xbf16>, vector<16x128xf32> -> vector<16x128xf32>
    %c0_18 = arith.constant 0 : index
    %c0_19 = arith.constant 0 : index
    %37 = vector.load %arg9[%c0_18, %c0_19] : memref<1x128xf32, #tpu.memory_space<vmem>>, vector<1x128xf32>
    %38 = vector.broadcast %37 : vector<1x128xf32> to vector<16x128xf32>
    %39 = arith.addf %36, %38 : vector<16x128xf32>
    %40 = arith.subf %39, %18 : vector<16x128xf32>
    %41 = arith.mulf %40, %40 : vector<16x128xf32>
    %cst_20 = arith.constant dense<0.000000e+00> : vector<16xf32>
    %42 = vector.multi_reduction <add>, %41, %cst_20 [1] : vector<16x128xf32> to vector<16xf32>
    %43 = vector.shape_cast %42 : vector<16xf32> to vector<16x1xf32>
    %cst_21 = arith.constant 1.562500e-02 : f32
    %44 = vector.broadcast %cst_21 : f32 to vector<16x1xf32>
    %45 = arith.mulf %43, %44 : vector<16x1xf32>
    %46 = arith.mulf %45, %3 : vector<16x1xf32>
    %cst_22 = arith.constant dense<0.000000e+00> : vector<1xf32>
    %47 = vector.multi_reduction <add>, %46, %cst_22 [0] : vector<16x1xf32> to vector<1xf32>
    %48 = vector.shape_cast %47 : vector<1xf32> to vector<1x1xf32>
    %49 = vector.shape_cast %48 : vector<1x1xf32> to vector<1x1xf32>
    %50 = vector.broadcast %49 : vector<1x1xf32> to vector<8x128xf32>
    %c0_23 = arith.constant 0 : index
    %c0_24 = arith.constant 0 : index
    %51 = vector.load %arg10[%c0_23, %c0_24] : memref<8x128xf32, #tpu.memory_space<vmem>>, vector<8x128xf32>
    tpu.vector_store %arg10[%c0_23, %c0_24], %50 {strides = array<i32>} : memref<8x128xf32, #tpu.memory_space<vmem>>, vector<8x128xf32>,
    return
  }
  func.func @transform_0(%arg0: i32) -> (i32, i32) {
    %c0_i32 = arith.constant 0 : i32
    %c0_i32_0 = arith.constant 0 : i32
    return %arg0, %c0_i32 : i32, i32
  }
  func.func @transform_1(%arg0: i32) -> (i32, i32) {
    %c0_i32 = arith.constant 0 : i32
    %c0_i32_0 = arith.constant 0 : i32
    return %arg0, %c0_i32 : i32, i32
  }
  func.func @transform_2(%arg0: i32) -> (i32, i32) {
    %c0_i32 = arith.constant 0 : i32
    %c0_i32_0 = arith.constant 0 : i32
    return %arg0, %c0_i32 : i32, i32
  }
  func.func @transform_3(%arg0: i32) -> (i32, i32) {
    %c0_i32 = arith.constant 0 : i32
    %c0_i32_0 = arith.constant 0 : i32
    return %arg0, %c0_i32 : i32, i32
  }
  func.func @transform_4(%arg0: i32) -> (i32, i32) {
    %c0_i32 = arith.constant 0 : i32
    %c0_i32_0 = arith.constant 0 : i32
    %c0_i32_1 = arith.constant 0 : i32
    return %c0_i32, %c0_i32_0 : i32, i32
  }
  func.func @transform_5(%arg0: i32) -> (i32, i32) {
    %c0_i32 = arith.constant 0 : i32
    %c0_i32_0 = arith.constant 0 : i32
    %c0_i32_1 = arith.constant 0 : i32
    return %c0_i32, %c0_i32_0 : i32, i32
  }
  func.func @transform_6(%arg0: i32) -> (i32, i32) {
    %c0_i32 = arith.constant 0 : i32
    %c0_i32_0 = arith.constant 0 : i32
    %c0_i32_1 = arith.constant 0 : i32
    return %c0_i32, %c0_i32_0 : i32, i32
  }
  func.func @transform_7(%arg0: i32) -> (i32, i32) {
    %c0_i32 = arith.constant 0 : i32
    %c0_i32_0 = arith.constant 0 : i32
    %c0_i32_1 = arith.constant 0 : i32
    return %c0_i32, %c0_i32_0 : i32, i32
  }
  func.func @transform_8(%arg0: i32) -> (i32, i32) {
    %c0_i32 = arith.constant 0 : i32
    %c0_i32_0 = arith.constant 0 : i32
    %c0_i32_1 = arith.constant 0 : i32
    return %c0_i32, %c0_i32_0 : i32, i32
  }
  func.func @transform_9(%arg0: i32) -> (i32, i32) {
    %c0_i32 = arith.constant 0 : i32
    %c0_i32_0 = arith.constant 0 : i32
    return %arg0, %c0_i32 : i32, i32
  }
}

</mosaic_0001>

<llo_original>
// kernel: tpu_custom_call.1
$region0: #{tpu_custom_call.1}
  #allocation0 [shape = 'u32[]', space=smem, size = 0x4, offset = 0x4, fixed_abs, tag = 'smem constant byte address 0x4 - core index']
  #allocation1 [shape = 'u32[144,128]{1,0:T(1,128)}', space=vmem, size = 0x12000, scoped, tag = 'internal scratch']
  %s0 = inlined_call_operand.hbm [shape: bf16[16,1024], index: 0, kind: input, shape index: {}]
  %s1 = inlined_call_operand.vmem [shape: bf16[16,128], index: 1, kind: input, shape index: {}]
  %s2 = inlined_call_operand.vmem [shape: bf16[16,128], index: 2, kind: input, shape index: {}]
  %s3 = inlined_call_operand.vmem [shape: f32[16,8], index: 3, kind: input, shape index: {}]
  %s4 = inlined_call_operand.hbm [shape: bf16[1024,128], index: 4, kind: input, shape index: {}]
  %s5 = inlined_call_operand.vmem [shape: f32[1,128], index: 5, kind: input, shape index: {}]
  %s6 = inlined_call_operand.hbm [shape: bf16[128,128], index: 6, kind: input, shape index: {}]
  %s7 = inlined_call_operand.hbm [shape: bf16[128,128], index: 7, kind: input, shape index: {}]
  %s8 = inlined_call_operand.vmem [shape: f32[1,128], index: 8, kind: input, shape index: {}]
  %s9 = inlined_call_operand.hbm [shape: f32[8,128], index: 9, kind: output, shape index: {}]
  %s10 = sld [smem:[#allocation0]]
  $region62: #{tpu_custom_call.1} parent=0
    _
  %s12 = ssub.s32 1, %s10
  %s13 = scalar_select 0, %s12, %s10
  $region1: #{tpu_custom_call.1} parent=0
    #allocation2 [shape = 'u8[32768]{0}', space=vmem, size = 0x8000, scoped, tag = 'input window, operand 0, single buffered']
    #allocation3 [shape = 's32[1]{0}', space=sflag, size = 0x4, scoped, tag = 'scoped memory for tpu_custom_call.1']
    #allocation4 [shape = 's32[1]{0}', space=sflag, size = 0x4, scoped, tag = 'scoped memory for tpu_custom_call.1']
    #allocation5 [shape = 'u8[262144]{0}', space=vmem, size = 0x40000, scoped, tag = 'input window, operand 4, single buffered']
    #allocation6 [shape = 's32[1]{0}', space=sflag, size = 0x4, scoped, tag = 'scoped memory for tpu_custom_call.1']
    #allocation7 [shape = 'u8[32768]{0}', space=vmem, size = 0x8000, scoped, tag = 'input window, operand 6, single buffered']
    #allocation8 [shape = 'u8[32768]{0}', space=vmem, size = 0x8000, scoped, tag = 'input window, operand 7, single buffered']
    #allocation9 [shape = 's32[1]{0}', space=sflag, size = 0x4, scoped, tag = 'scoped memory for tpu_custom_call.1']
    #allocation10 [shape = 'u8[4096]{0}', space=vmem, size = 0x1000, scoped, tag = 'output window, operand 0, single buffered']
    %14 = vsyncpa [#allocation3], 0
    %15 = vsyncpa [#allocation6], 0
    %16 = vsyncpa [#allocation9], 0
    %17 = vsyncpa [#allocation4], 0
    // Predicated region
    $region2: #{tpu_custom_call.1} parent=1 // pred_check
      _
    $region3: #{tpu_custom_call.1} parent=1 // pred_check_branch
      %19 = sbr.rel (0) target = $region5
    $region4: #{tpu_custom_call.1} parent=1 // pred_region
      %s21 = ssub.s32 1024, 1024
      %22 = vsyncadd [#allocation3], %s21
      %s23 = sshll.u32 [#allocation2], 4
      %s24 = int_to_ptr.vmem [resolvable:$true] %s23
      %29 = dma.hbm_to_vmem [thread:$0]  %s0, 1024, %s24, [#allocation3], 512, 512, 32
    $region5: #{tpu_custom_call.1} parent=1 // pred_fallthru
      _
    // Predicated region
    $region6: #{tpu_custom_call.1} parent=1 // pred_check
      _
    $region7: #{tpu_custom_call.1} parent=1 // pred_check_branch
      %31 = sbr.rel (0) target = $region9
    $region8: #{tpu_custom_call.1} parent=1 // pred_region
      _
    $region9: #{tpu_custom_call.1} parent=1 // pred_fallthru
      _
    // Predicated region
    $region10: #{tpu_custom_call.1} parent=1 // pred_check
      _
    $region11: #{tpu_custom_call.1} parent=1 // pred_check_branch
      %33 = sbr.rel (0) target = $region13
    $region12: #{tpu_custom_call.1} parent=1 // pred_region
      _
    $region13: #{tpu_custom_call.1} parent=1 // pred_fallthru
      _
    // Predicated region
    $region14: #{tpu_custom_call.1} parent=1 // pred_check
      _
    $region15: #{tpu_custom_call.1} parent=1 // pred_check_branch
      %35 = sbr.rel (0) target = $region17
    $region16: #{tpu_custom_call.1} parent=1 // pred_region
      _
    $region17: #{tpu_custom_call.1} parent=1 // pred_fallthru
      _
    // Predicated region
    $region18: #{tpu_custom_call.1} parent=1 // pred_check
      _
    $region19: #{tpu_custom_call.1} parent=1 // pred_check_branch
      %37 = sbr.rel (0) target = $region21
    $region20: #{tpu_custom_call.1} parent=1 // pred_region
      %s39 = ssub.s32 8192, 8192
      %40 = vsyncadd [#allocation6], %s39
      %s41 = sshll.u32 [#allocation5], 4
      %s42 = int_to_ptr.vmem [resolvable:$true] %s41
      %47 = dma.hbm_to_vmem [thread:$0]  %s4, 8192, %s42, [#allocation6], 64, 64, 4
    $region21: #{tpu_custom_call.1} parent=1 // pred_fallthru
      _
    // Predicated region
    $region22: #{tpu_custom_call.1} parent=1 // pred_check
      _
    $region23: #{tpu_custom_call.1} parent=1 // pred_check_branch
      %49 = sbr.rel (0) target = $region25
    $region24: #{tpu_custom_call.1} parent=1 // pred_region
      _
    $region25: #{tpu_custom_call.1} parent=1 // pred_fallthru
      _
    // Predicated region
    $region26: #{tpu_custom_call.1} parent=1 // pred_check
      _
    $region27: #{tpu_custom_call.1} parent=1 // pred_check_branch
      %51 = sbr.rel (0) target = $region29
    $region28: #{tpu_custom_call.1} parent=1 // pred_region
      %s53 = ssub.s32 1024, 1024
      %54 = vsyncadd [#allocation6], %s53
      %s55 = sshll.u32 [#allocation7], 4
      %s56 = int_to_ptr.vmem [resolvable:$true] %s55
      %61 = dma.hbm_to_vmem [thread:$0]  %s6, 1024, %s56, [#allocation6], 64, 64, 4
    $region29: #{tpu_custom_call.1} parent=1 // pred_fallthru
      _
    // Predicated region
    $region30: #{tpu_custom_call.1} parent=1 // pred_check
      _
    $region31: #{tpu_custom_call.1} parent=1 // pred_check_branch
      %63 = sbr.rel (0) target = $region33
    $region32: #{tpu_custom_call.1} parent=1 // pred_region
      %s65 = ssub.s32 1024, 1024
      %66 = vsyncadd [#allocation9], %s65
      %s67 = sshll.u32 [#allocation8], 4
      %s68 = int_to_ptr.vmem [resolvable:$true] %s67
      %73 = dma.hbm_to_vmem [thread:$0]  %s7, 1024, %s68, [#allocation9], 64, 64, 4
    $region33: #{tpu_custom_call.1} parent=1 // pred_fallthru
      _
    // Predicated region
    $region34: #{tpu_custom_call.1} parent=1 // pred_check
      _
    $region35: #{tpu_custom_call.1} parent=1 // pred_check_branch
      %75 = sbr.rel (0) target = $region37
    $region36: #{tpu_custom_call.1} parent=1 // pred_region
      _
    $region37: #{tpu_custom_call.1} parent=1 // pred_fallthru
      _
    // Predicated region
    $region38: #{tpu_custom_call.1} parent=1 // pred_check
      _
    $region39: #{tpu_custom_call.1} parent=1 // pred_check_branch
      %77 = sbr.rel (0) target = $region41
    $region40: #{tpu_custom_call.1} parent=1 // pred_region
      %78 = dma.done [#allocation3], 1024
    $region41: #{tpu_custom_call.1} parent=1 // pred_fallthru
      _
    // Predicated region
    $region42: #{tpu_custom_call.1} parent=1 // pred_check
      _
    $region43: #{tpu_custom_call.1} parent=1 // pred_check_branch
      %80 = sbr.rel (0) target = $region45
    $region44: #{tpu_custom_call.1} parent=1 // pred_region
      %81 = dma.done [#allocation6], 8192
    $region45: #{tpu_custom_call.1} parent=1 // pred_fallthru
      _
    // Predicated region
    $region46: #{tpu_custom_call.1} parent=1 // pred_check
      _
    $region47: #{tpu_custom_call.1} parent=1 // pred_check_branch
      %83 = sbr.rel (0) target = $region49
    $region48: #{tpu_custom_call.1} parent=1 // pred_region
      %84 = dma.done [#allocation6], 1024
    $region49: #{tpu_custom_call.1} parent=1 // pred_fallthru
      _
    // Predicated region
    $region50: #{tpu_custom_call.1} parent=1 // pred_check
      _
    $region51: #{tpu_custom_call.1} parent=1 // pred_check_branch
      %86 = sbr.rel (0) target = $region53
    $region52: #{tpu_custom_call.1} parent=1 // pred_region
      %87 = dma.done [#allocation9], 1024
    $region53: #{tpu_custom_call.1} parent=1 // pred_fallthru
      _
    %v89 = vld [vmem:[%s3] sm:$0xff]
    %v90 = vld [vmem:[%s3 + $0x8] sm:$0xff]
    %v91 = vld [vmem:[#allocation2] sm:$0xff]
    %v92 = vld [vmem:[#allocation2 + $0x8] sm:$0xff]
    %v93 = vld [vmem:[#allocation2 + $0x10] sm:$0xff]
    %v94 = vld [vmem:[#allocation2 + $0x18] sm:$0xff]
    %v95 = vld [vmem:[#allocation2 + $0x20] sm:$0xff]
    %v96 = vld [vmem:[#allocation2 + $0x28] sm:$0xff]
    %v97 = vld [vmem:[#allocation2 + $0x30] sm:$0xff]
    %v98 = vld [vmem:[#allocation2 + $0x38] sm:$0xff]
    %v99 = vld [vmem:[#allocation5] sm:$0xf]
    %v100 = vld [vmem:[#allocation5 + $0x4] sm:$0xf]
    %v101 = vld [vmem:[#allocation5 + $0x8] sm:$0xf]
    %v102 = vld [vmem:[#allocation5 + $0xc] sm:$0xf]
    %v103 = vld [vmem:[#allocation5 + $0x10] sm:$0xf]
    %v104 = vld [vmem:[#allocation5 + $0x14] sm:$0xf]
    %v105 = vld [vmem:[#allocation5 + $0x18] sm:$0xf]
    %v106 = vld [vmem:[#allocation5 + $0x1c] sm:$0xf]
    %v107 = vld [vmem:[#allocation5 + $0x20] sm:$0xf]
    %v108 = vld [vmem:[#allocation5 + $0x24] sm:$0xf]
    %v109 = vld [vmem:[#allocation5 + $0x28] sm:$0xf]
    %v110 = vld [vmem:[#allocation5 + $0x2c] sm:$0xf]
    %v111 = vld [vmem:[#allocation5 + $0x30] sm:$0xf]
    %v112 = vld [vmem:[#allocation5 + $0x34] sm:$0xf]
    %v113 = vld [vmem:[#allocation5 + $0x38] sm:$0xf]
    %v114 = vld [vmem:[#allocation5 + $0x3c] sm:$0xf]
    %v115 = vld [vmem:[#allocation5 + $0x40] sm:$0xf]
    %v116 = vld [vmem:[#allocation5 + $0x44] sm:$0xf]
    %v117 = vld [vmem:[#allocation5 + $0x48] sm:$0xf]
    %v118 = vld [vmem:[#allocation5 + $0x4c] sm:$0xf]
    %v119 = vld [vmem:[#allocation5 + $0x50] sm:$0xf]
    %v120 = vld [vmem:[#allocation5 + $0x54] sm:$0xf]
    %v121 = vld [vmem:[#allocation5 + $0x58] sm:$0xf]
    %v122 = vld [vmem:[#allocation5 + $0x5c] sm:$0xf]
    %v123 = vld [vmem:[#allocation5 + $0x60] sm:$0xf]
    %v124 = vld [vmem:[#allocation5 + $0x64] sm:$0xf]
    %v125 = vld [vmem:[#allocation5 + $0x68] sm:$0xf]
    %v126 = vld [vmem:[#allocation5 + $0x6c] sm:$0xf]
    %v127 = vld [vmem:[#allocation5 + $0x70] sm:$0xf]
    %v128 = vld [vmem:[#allocation5 + $0x74] sm:$0xf]
    %v129 = vld [vmem:[#allocation5 + $0x78] sm:$0xf]
    %v130 = vld [vmem:[#allocation5 + $0x7c] sm:$0xf]
    %v131 = vld [vmem:[#allocation5 + $0x80] sm:$0xf]
    %v132 = vld [vmem:[#allocation5 + $0x84] sm:$0xf]
    %v133 = vld [vmem:[#allocation5 + $0x88] sm:$0xf]
    %v134 = vld [vmem:[#allocation5 + $0x8c] sm:$0xf]
    %v135 = vld [vmem:[#allocation5 + $0x90] sm:$0xf]
    %v136 = vld [vmem:[#allocation5 + $0x94] sm:$0xf]
    %v137 = vld [vmem:[#allocation5 + $0x98] sm:$0xf]
    %v138 = vld [vmem:[#allocation5 + $0x9c] sm:$0xf]
    %v139 = vld [vmem:[#allocation5 + $0xa0] sm:$0xf]
    %v140 = vld [vmem:[#allocation5 + $0xa4] sm:$0xf]
    %v141 = vld [vmem:[#allocation5 + $0xa8] sm:$0xf]
    %v142 = vld [vmem:[#allocation5 + $0xac] sm:$0xf]
    %v143 = vld [vmem:[#allocation5 + $0xb0] sm:$0xf]
    %v144 = vld [vmem:[#allocation5 + $0xb4] sm:$0xf]
    %v145 = vld [vmem:[#allocation5 + $0xb8] sm:$0xf]
    %v146 = vld [vmem:[#allocation5 + $0xbc] sm:$0xf]
    %v147 = vld [vmem:[#allocation5 + $0xc0] sm:$0xf]
    %v148 = vld [vmem:[#allocation5 + $0xc4] sm:$0xf]
    %v149 = vld [vmem:[#allocation5 + $0xc8] sm:$0xf]
    %v150 = vld [vmem:[#allocation5 + $0xcc] sm:$0xf]
    %v151 = vld [vmem:[#allocation5 + $0xd0] sm:$0xf]
    %v152 = vld [vmem:[#allocation5 + $0xd4] sm:$0xf]
    %v153 = vld [vmem:[#allocation5 + $0xd8] sm:$0xf]
    %v154 = vld [vmem:[#allocation5 + $0xdc] sm:$0xf]
    %v155 = vld [vmem:[#allocation5 + $0xe0] sm:$0xf]
    %v156 = vld [vmem:[#allocation5 + $0xe4] sm:$0xf]
    %v157 = vld [vmem:[#allocation5 + $0xe8] sm:$0xf]
    %v158 = vld [vmem:[#allocation5 + $0xec] sm:$0xf]
    %v159 = vld [vmem:[#allocation5 + $0xf0] sm:$0xf]
    %v160 = vld [vmem:[#allocation5 + $0xf4] sm:$0xf]
    %v161 = vld [vmem:[#allocation5 + $0xf8] sm:$0xf]
    %v162 = vld [vmem:[#allocation5 + $0xfc] sm:$0xf]
    %v163 = vld [vmem:[#allocation5 + $0x100] sm:$0xf]
    %v164 = vld [vmem:[#allocation5 + $0x104] sm:$0xf]
    %v165 = vld [vmem:[#allocation5 + $0x108] sm:$0xf]
    %v166 = vld [vmem:[#allocation5 + $0x10c] sm:$0xf]
    %v167 = vld [vmem:[#allocation5 + $0x110] sm:$0xf]
    %v168 = vld [vmem:[#allocation5 + $0x114] sm:$0xf]
    %v169 = vld [vmem:[#allocation5 + $0x118] sm:$0xf]
    %v170 = vld [vmem:[#allocation5 + $0x11c] sm:$0xf]
    %v171 = vld [vmem:[#allocation5 + $0x120] sm:$0xf]
    %v172 = vld [vmem:[#allocation5 + $0x124] sm:$0xf]
    %v173 = vld [vmem:[#allocation5 + $0x128] sm:$0xf]
    %v174 = vld [vmem:[#allocation5 + $0x12c] sm:$0xf]
    %v175 = vld [vmem:[#allocation5 + $0x130] sm:$0xf]
    %v176 = vld [vmem:[#allocation5 + $0x134] sm:$0xf]
    %v177 = vld [vmem:[#allocation5 + $0x138] sm:$0xf]
    %v178 = vld [vmem:[#allocation5 + $0x13c] sm:$0xf]
    %v179 = vld [vmem:[#allocation5 + $0x140] sm:$0xf]
    %v180 = vld [vmem:[#allocation5 + $0x144] sm:$0xf]
    %v181 = vld [vmem:[#allocation5 + $0x148] sm:$0xf]
    %v182 = vld [vmem:[#allocation5 + $0x14c] sm:$0xf]
    %v183 = vld [vmem:[#allocation5 + $0x150] sm:$0xf]
    %v184 = vld [vmem:[#allocation5 + $0x154] sm:$0xf]
    %v185 = vld [vmem:[#allocation5 + $0x158] sm:$0xf]
    %v186 = vld [vmem:[#allocation5 + $0x15c] sm:$0xf]
    %v187 = vld [vmem:[#allocation5 + $0x160] sm:$0xf]
    %v188 = vld [vmem:[#allocation5 + $0x164] sm:$0xf]
    %v189 = vld [vmem:[#allocation5 + $0x168] sm:$0xf]
    %v190 = vld [vmem:[#allocation5 + $0x16c] sm:$0xf]
    %v191 = vld [vmem:[#allocation5 + $0x170] sm:$0xf]
    %v192 = vld [vmem:[#allocation5 + $0x174] sm:$0xf]
    %v193 = vld [vmem:[#allocation5 + $0x178] sm:$0xf]
    %v194 = vld [vmem:[#allocation5 + $0x17c] sm:$0xf]
    %v195 = vld [vmem:[#allocation5 + $0x180] sm:$0xf]
    %v196 = vld [vmem:[#allocation5 + $0x184] sm:$0xf]
    %v197 = vld [vmem:[#allocation5 + $0x188] sm:$0xf]
    %v198 = vld [vmem:[#allocation5 + $0x18c] sm:$0xf]
    %v199 = vld [vmem:[#allocation5 + $0x190] sm:$0xf]
    %v200 = vld [vmem:[#allocation5 + $0x194] sm:$0xf]
    %v201 = vld [vmem:[#allocation5 + $0x198] sm:$0xf]
    %v202 = vld [vmem:[#allocation5 + $0x19c] sm:$0xf]
    %v203 = vld [vmem:[#allocation5 + $0x1a0] sm:$0xf]
    %v204 = vld [vmem:[#allocation5 + $0x1a4] sm:$0xf]
    %v205 = vld [vmem:[#allocation5 + $0x1a8] sm:$0xf]
    %v206 = vld [vmem:[#allocation5 + $0x1ac] sm:$0xf]
    %v207 = vld [vmem:[#allocation5 + $0x1b0] sm:$0xf]
    %v208 = vld [vmem:[#allocation5 + $0x1b4] sm:$0xf]
    %v209 = vld [vmem:[#allocation5 + $0x1b8] sm:$0xf]
    %v210 = vld [vmem:[#allocation5 + $0x1bc] sm:$0xf]
    %v211 = vld [vmem:[#allocation5 + $0x1c0] sm:$0xf]
    %v212 = vld [vmem:[#allocation5 + $0x1c4] sm:$0xf]
    %v213 = vld [vmem:[#allocation5 + $0x1c8] sm:$0xf]
    %v214 = vld [vmem:[#allocation5 + $0x1cc] sm:$0xf]
    %v215 = vld [vmem:[#allocation5 + $0x1d0] sm:$0xf]
    %v216 = vld [vmem:[#allocation5 + $0x1d4] sm:$0xf]
    %v217 = vld [vmem:[#allocation5 + $0x1d8] sm:$0xf]
    %v218 = vld [vmem:[#allocation5 + $0x1dc] sm:$0xf]
    %v219 = vld [vmem:[#allocation5 + $0x1e0] sm:$0xf]
    %v220 = vld [vmem:[#allocation5 + $0x1e4] sm:$0xf]
    %v221 = vld [vmem:[#allocation5 + $0x1e8] sm:$0xf]
    %v222 = vld [vmem:[#allocation5 + $0x1ec] sm:$0xf]
    %v223 = vld [vmem:[#allocation5 + $0x1f0] sm:$0xf]
    %v224 = vld [vmem:[#allocation5 + $0x1f4] sm:$0xf]
    %v225 = vld [vmem:[#allocation5 + $0x1f8] sm:$0xf]
    %v226 = vld [vmem:[#allocation5 + $0x1fc] sm:$0xf]
    %v227 = vld [vmem:[%s5] sm:$0x1]
    %v229 = vlaneseq
    %v230 = vshrl.u32 %v229, 7
    %v231 = vsub.s32 0, %v230
    %v232 = vrot.slane %v227, %v231
    %v242 = vunpack.c.l.b16 %v91
    %v243 = vunpack.c.h.b16 %v91
    %v244 = vunpack.c.l.b16 %v92
    %v245 = vunpack.c.h.b16 %v92
    %v246 = vunpack.c.l.b16 %v93
    %v247 = vunpack.c.h.b16 %v93
    %v248 = vunpack.c.l.b16 %v94
    %v249 = vunpack.c.h.b16 %v94
    %v250 = vunpack.c.l.b16 %v95
    %v251 = vunpack.c.h.b16 %v95
    %v252 = vunpack.c.l.b16 %v96
    %v253 = vunpack.c.h.b16 %v96
    %v254 = vunpack.c.l.b16 %v97
    %v255 = vunpack.c.h.b16 %v97
    %v256 = vunpack.c.l.b16 %v98
    %v257 = vunpack.c.h.b16 %v98
    %v258 = vpack.c.b16 %v250, %v242
    %v259 = vpack.c.b16 %v251, %v243
    %v260 = vpack.c.b16 %v252, %v244
    %v261 = vpack.c.b16 %v253, %v245
    %v262 = vpack.c.b16 %v254, %v246
    %v263 = vpack.c.b16 %v255, %v247
    %v264 = vpack.c.b16 %v256, %v248
    %v265 = vpack.c.b16 %v257, %v249
    %v402 = vunpack.c.l.b16 %v99
    %v403 = vunpack.c.l.b16 %v100
    %v404 = vunpack.c.l.b16 %v101
    %v405 = vunpack.c.l.b16 %v102
    %v406 = vunpack.c.l.b16 %v103
    %v407 = vunpack.c.l.b16 %v104
    %v408 = vunpack.c.l.b16 %v105
    %v409 = vunpack.c.l.b16 %v106
    %v410 = vunpack.c.l.b16 %v107
    %v411 = vunpack.c.l.b16 %v108
    %v412 = vunpack.c.l.b16 %v109
    %v413 = vunpack.c.l.b16 %v110
    %v414 = vunpack.c.l.b16 %v111
    %v415 = vunpack.c.l.b16 %v112
    %v416 = vunpack.c.l.b16 %v113
    %v417 = vunpack.c.l.b16 %v114
    %v418 = vunpack.c.l.b16 %v115
    %v419 = vunpack.c.l.b16 %v116
    %v420 = vunpack.c.l.b16 %v117
    %v421 = vunpack.c.l.b16 %v118
    %v422 = vunpack.c.l.b16 %v119
    %v423 = vunpack.c.l.b16 %v120
    %v424 = vunpack.c.l.b16 %v121
    %v425 = vunpack.c.l.b16 %v122
    %v426 = vunpack.c.l.b16 %v123
    %v427 = vunpack.c.l.b16 %v124
    %v428 = vunpack.c.l.b16 %v125
    %v429 = vunpack.c.l.b16 %v126
    %v430 = vunpack.c.l.b16 %v127
    %v431 = vunpack.c.l.b16 %v128
    %v432 = vunpack.c.l.b16 %v129
    %v433 = vunpack.c.l.b16 %v130
    %v434 = vunpack.c.l.b16 %v131
    %v435 = vunpack.c.l.b16 %v132
    %v436 = vunpack.c.l.b16 %v133
    %v437 = vunpack.c.l.b16 %v134
    %v438 = vunpack.c.l.b16 %v135
    %v439 = vunpack.c.l.b16 %v136
    %v440 = vunpack.c.l.b16 %v137
    %v441 = vunpack.c.l.b16 %v138
    %v442 = vunpack.c.l.b16 %v139
    %v443 = vunpack.c.l.b16 %v140
    %v444 = vunpack.c.l.b16 %v141
    %v445 = vunpack.c.l.b16 %v142
    %v446 = vunpack.c.l.b16 %v143
    %v447 = vunpack.c.l.b16 %v144
    %v448 = vunpack.c.l.b16 %v145
    %v449 = vunpack.c.l.b16 %v146
    %v450 = vunpack.c.l.b16 %v147
    %v451 = vunpack.c.l.b16 %v148
    %v452 = vunpack.c.l.b16 %v149
    %v453 = vunpack.c.l.b16 %v150
    %v454 = vunpack.c.l.b16 %v151
    %v455 = vunpack.c.l.b16 %v152
    %v456 = vunpack.c.l.b16 %v153
    %v457 = vunpack.c.l.b16 %v154
    %v458 = vunpack.c.l.b16 %v155
    %v459 = vunpack.c.l.b16 %v156
    %v460 = vunpack.c.l.b16 %v157
    %v461 = vunpack.c.l.b16 %v158
    %v462 = vunpack.c.l.b16 %v159
    %v463 = vunpack.c.l.b16 %v160
    %v464 = vunpack.c.l.b16 %v161
    %v465 = vunpack.c.l.b16 %v162
    %v466 = vunpack.c.l.b16 %v163
    %v467 = vunpack.c.l.b16 %v164
    %v468 = vunpack.c.l.b16 %v165
    %v469 = vunpack.c.l.b16 %v166
    %v470 = vunpack.c.l.b16 %v167
    %v471 = vunpack.c.l.b16 %v168
    %v472 = vunpack.c.l.b16 %v169
    %v473 = vunpack.c.l.b16 %v170
    %v474 = vunpack.c.l.b16 %v171
    %v475 = vunpack.c.l.b16 %v172
    %v476 = vunpack.c.l.b16 %v173
    %v477 = vunpack.c.l.b16 %v174
    %v478 = vunpack.c.l.b16 %v175
    %v479 = vunpack.c.l.b16 %v176
    %v480 = vunpack.c.l.b16 %v177
    %v481 = vunpack.c.l.b16 %v178
    %v482 = vunpack.c.l.b16 %v179
    %v483 = vunpack.c.l.b16 %v180
    %v484 = vunpack.c.l.b16 %v181
    %v485 = vunpack.c.l.b16 %v182
    %v486 = vunpack.c.l.b16 %v183
    %v487 = vunpack.c.l.b16 %v184
    %v488 = vunpack.c.l.b16 %v185
    %v489 = vunpack.c.l.b16 %v186
    %v490 = vunpack.c.l.b16 %v187
    %v491 = vunpack.c.l.b16 %v188
    %v492 = vunpack.c.l.b16 %v189
    %v493 = vunpack.c.l.b16 %v190
    %v494 = vunpack.c.l.b16 %v191
    %v495 = vunpack.c.l.b16 %v192
    %v496 = vunpack.c.l.b16 %v193
    %v497 = vunpack.c.l.b16 %v194
    %v498 = vunpack.c.l.b16 %v195
    %v499 = vunpack.c.l.b16 %v196
    %v500 = vunpack.c.l.b16 %v197
    %v501 = vunpack.c.l.b16 %v198
    %v502 = vunpack.c.l.b16 %v199
    %v503 = vunpack.c.l.b16 %v200
    %v504 = vunpack.c.l.b16 %v201
    %v505 = vunpack.c.l.b16 %v202
    %v506 = vunpack.c.l.b16 %v203
    %v507 = vunpack.c.l.b16 %v204
    %v508 = vunpack.c.l.b16 %v205
    %v509 = vunpack.c.l.b16 %v206
    %v510 = vunpack.c.l.b16 %v207
    %v511 = vunpack.c.l.b16 %v208
    %v512 = vunpack.c.l.b16 %v209
    %v513 = vunpack.c.l.b16 %v210
    %v514 = vunpack.c.l.b16 %v211
    %v515 = vunpack.c.l.b16 %v212
    %v516 = vunpack.c.l.b16 %v213
    %v517 = vunpack.c.l.b16 %v214
    %v518 = vunpack.c.l.b16 %v215
    %v519 = vunpack.c.l.b16 %v216
    %v520 = vunpack.c.l.b16 %v217
    %v521 = vunpack.c.l.b16 %v218
    %v522 = vunpack.c.l.b16 %v219
    %v523 = vunpack.c.l.b16 %v220
    %v524 = vunpack.c.l.b16 %v221
    %v525 = vunpack.c.l.b16 %v222
    %v526 = vunpack.c.l.b16 %v223
    %v527 = vunpack.c.l.b16 %v224
    %v528 = vunpack.c.l.b16 %v225
    %v529 = vunpack.c.l.b16 %v226
    %v530 = vpack.c.b16 %v403, %v402
    %v531 = vpack.c.b16 %v405, %v404
    %v532 = vpack.c.b16 %v407, %v406
    %v533 = vpack.c.b16 %v409, %v408
    %v534 = vpack.c.b16 %v411, %v410
    %v535 = vpack.c.b16 %v413, %v412
    %v536 = vpack.c.b16 %v415, %v414
    %v537 = vpack.c.b16 %v417, %v416
    %v538 = vpack.c.b16 %v419, %v418
    %v539 = vpack.c.b16 %v421, %v420
    %v540 = vpack.c.b16 %v423, %v422
    %v541 = vpack.c.b16 %v425, %v424
    %v542 = vpack.c.b16 %v427, %v426
    %v543 = vpack.c.b16 %v429, %v428
    %v544 = vpack.c.b16 %v431, %v430
    %v545 = vpack.c.b16 %v433, %v432
    %v546 = vpack.c.b16 %v435, %v434
    %v547 = vpack.c.b16 %v437, %v436
    %v548 = vpack.c.b16 %v439, %v438
    %v549 = vpack.c.b16 %v441, %v440
    %v550 = vpack.c.b16 %v443, %v442
    %v551 = vpack.c.b16 %v445, %v444
    %v552 = vpack.c.b16 %v447, %v446
    %v553 = vpack.c.b16 %v449, %v448
    %v554 = vpack.c.b16 %v451, %v450
    %v555 = vpack.c.b16 %v453, %v452
    %v556 = vpack.c.b16 %v455, %v454
    %v557 = vpack.c.b16 %v457, %v456
    %v558 = vpack.c.b16 %v459, %v458
    %v559 = vpack.c.b16 %v461, %v460
    %v560 = vpack.c.b16 %v463, %v462
    %v561 = vpack.c.b16 %v465, %v464
    %v562 = vpack.c.b16 %v467, %v466
    %v563 = vpack.c.b16 %v469, %v468
    %v564 = vpack.c.b16 %v471, %v470
    %v565 = vpack.c.b16 %v473, %v472
    %v566 = vpack.c.b16 %v475, %v474
    %v567 = vpack.c.b16 %v477, %v476
    %v568 = vpack.c.b16 %v479, %v478
    %v569 = vpack.c.b16 %v481, %v480
    %v570 = vpack.c.b16 %v483, %v482
    %v571 = vpack.c.b16 %v485, %v484
    %v572 = vpack.c.b16 %v487, %v486
    %v573 = vpack.c.b16 %v489, %v488
    %v574 = vpack.c.b16 %v491, %v490
    %v575 = vpack.c.b16 %v493, %v492
    %v576 = vpack.c.b16 %v495, %v494
    %v577 = vpack.c.b16 %v497, %v496
    %v578 = vpack.c.b16 %v499, %v498
    %v579 = vpack.c.b16 %v501, %v500
    %v580 = vpack.c.b16 %v503, %v502
    %v581 = vpack.c.b16 %v505, %v504
    %v582 = vpack.c.b16 %v507, %v506
    %v583 = vpack.c.b16 %v509, %v508
    %v584 = vpack.c.b16 %v511, %v510
    %v585 = vpack.c.b16 %v513, %v512
    %v586 = vpack.c.b16 %v515, %v514
    %v587 = vpack.c.b16 %v517, %v516
    %v588 = vpack.c.b16 %v519, %v518
    %v589 = vpack.c.b16 %v521, %v520
    %v590 = vpack.c.b16 %v523, %v522
    %v591 = vpack.c.b16 %v525, %v524
    %v592 = vpack.c.b16 %v527, %v526
    %v593 = vpack.c.b16 %v529, %v528
    %658 = vmatprep.subr.bf16.mxu0 0
    %659 = vmatpush1.bf16.msra.mxu0 %v530
    %660 = vmatprep.subr.bf16.mxu0 0
    %661 = vmatpush1.bf16.msra.mxu0 %v531
    %662 = vmatprep.subr.bf16.mxu0 0
    %663 = vmatpush1.bf16.msra.mxu0 %v532
    %664 = vmatprep.subr.bf16.mxu0 0
    %665 = vmatpush1.bf16.msra.mxu0 %v533
    %666 = vmatprep.subr.bf16.mxu0 0
    %667 = vmatpush1.bf16.msra.mxu0 %v534
    %668 = vmatprep.subr.bf16.mxu0 0
    %669 = vmatpush1.bf16.msra.mxu0 %v535
    %670 = vmatprep.subr.bf16.mxu0 0
    %671 = vmatpush1.bf16.msra.mxu0 %v536
    %672 = vmatprep.subr.bf16.mxu0 0
    %673 = vmatpush1.bf16.msra.mxu0 %v537
    %674 = vmatprep.subr.bf16.mxu0 0
    %675 = vmatpush1.bf16.msra.mxu0 %v538
    %676 = vmatprep.subr.bf16.mxu0 0
    %677 = vmatpush1.bf16.msra.mxu0 %v539
    %678 = vmatprep.subr.bf16.mxu0 0
    %679 = vmatpush1.bf16.msra.mxu0 %v540
    %680 = vmatprep.subr.bf16.mxu0 0
    %681 = vmatpush1.bf16.msra.mxu0 %v541
    %682 = vmatprep.subr.bf16.mxu0 0
    %683 = vmatpush1.bf16.msra.mxu0 %v542
    %684 = vmatprep.subr.bf16.mxu0 0
    %685 = vmatpush1.bf16.msra.mxu0 %v543
    %686 = vmatprep.subr.bf16.mxu0 0
    %687 = vmatpush1.bf16.msra.mxu0 %v544
    %688 = vmatprep.subr.bf16.mxu0 0
    %689 = vmatpush1.bf16.msra.mxu0 %v545
    %690 = vmatprep.mubr.bf16.mxu0 %v259
    %691 = vmatmul.mubr.bf16.gmra.mrb[0].mxu0 %v258
    %v692 = vpop.f32.mrb[0].mxu0
    %v693 = vadd.f32 %v232, %v692
    %v694 = vpop.f32.mrb[0].mxu0
    %v695 = vpop.f32.mrb[0].mxu0
    %v696 = vadd.f32 %v232, %v695
    %v697 = vpop.f32.mrb[0].mxu0
    %698 = vdwg.mxu0
    %699 = vmatprep.subr.bf16.mxu0 0
    %700 = vmatpush1.bf16.msra.mxu0 %v546
    %701 = vmatprep.subr.bf16.mxu0 0
    %702 = vmatpush1.bf16.msra.mxu0 %v547
    %703 = vmatprep.subr.bf16.mxu0 0
    %704 = vmatpush1.bf16.msra.mxu0 %v548
    %705 = vmatprep.subr.bf16.mxu0 0
    %706 = vmatpush1.bf16.msra.mxu0 %v549
    %707 = vmatprep.subr.bf16.mxu0 0
    %708 = vmatpush1.bf16.msra.mxu0 %v550
    %709 = vmatprep.subr.bf16.mxu0 0
    %710 = vmatpush1.bf16.msra.mxu0 %v551
    %711 = vmatprep.subr.bf16.mxu0 0
    %712 = vmatpush1.bf16.msra.mxu0 %v552
    %713 = vmatprep.subr.bf16.mxu0 0
    %714 = vmatpush1.bf16.msra.mxu0 %v553
    %715 = vmatprep.subr.bf16.mxu0 0
    %716 = vmatpush1.bf16.msra.mxu0 %v554
    %717 = vmatprep.subr.bf16.mxu0 0
    %718 = vmatpush1.bf16.msra.mxu0 %v555
    %719 = vmatprep.subr.bf16.mxu0 0
    %720 = vmatpush1.bf16.msra.mxu0 %v556
    %721 = vmatprep.subr.bf16.mxu0 0
    %722 = vmatpush1.bf16.msra.mxu0 %v557
    %723 = vmatprep.subr.bf16.mxu0 0
    %724 = vmatpush1.bf16.msra.mxu0 %v558
    %725 = vmatprep.subr.bf16.mxu0 0
    %726 = vmatpush1.bf16.msra.mxu0 %v559
    %727 = vmatprep.subr.bf16.mxu0 0
    %728 = vmatpush1.bf16.msra.mxu0 %v560
    %729 = vmatprep.subr.bf16.mxu0 0
    %730 = vmatpush1.bf16.msra.mxu0 %v561
    %731 = vmatprep.mubr.bf16.mxu0 %v261
    %732 = vmatmul.mubr.bf16.gmra.mrb[0].mxu0 %v260
    %v733 = vpop.f32.mrb[0].mxu0
    %v734 = vadd.f32 %v693, %v733
    %v735 = vpop.f32.mrb[0].mxu0
    %v736 = vpop.f32.mrb[0].mxu0
    %v737 = vadd.f32 %v696, %v736
    %v738 = vpop.f32.mrb[0].mxu0
    %739 = vdwg.mxu0
    %740 = vmatprep.subr.bf16.mxu0 0
    %741 = vmatpush1.bf16.msra.mxu0 %v562
    %742 = vmatprep.subr.bf16.mxu0 0
    %743 = vmatpush1.bf16.msra.mxu0 %v563
    %744 = vmatprep.subr.bf16.mxu0 0
    %745 = vmatpush1.bf16.msra.mxu0 %v564
    %746 = vmatprep.subr.bf16.mxu0 0
    %747 = vmatpush1.bf16.msra.mxu0 %v565
    %748 = vmatprep.subr.bf16.mxu0 0
    %749 = vmatpush1.bf16.msra.mxu0 %v566
    %750 = vmatprep.subr.bf16.mxu0 0
    %751 = vmatpush1.bf16.msra.mxu0 %v567
    %752 = vmatprep.subr.bf16.mxu0 0
    %753 = vmatpush1.bf16.msra.mxu0 %v568
    %754 = vmatprep.subr.bf16.mxu0 0
    %755 = vmatpush1.bf16.msra.mxu0 %v569
    %756 = vmatprep.subr.bf16.mxu0 0
    %757 = vmatpush1.bf16.msra.mxu0 %v570
    %758 = vmatprep.subr.bf16.mxu0 0
    %759 = vmatpush1.bf16.msra.mxu0 %v571
    %760 = vmatprep.subr.bf16.mxu0 0
    %761 = vmatpush1.bf16.msra.mxu0 %v572
    %762 = vmatprep.subr.bf16.mxu0 0
    %763 = vmatpush1.bf16.msra.mxu0 %v573
    %764 = vmatprep.subr.bf16.mxu0 0
    %765 = vmatpush1.bf16.msra.mxu0 %v574
    %766 = vmatprep.subr.bf16.mxu0 0
    %767 = vmatpush1.bf16.msra.mxu0 %v575
    %768 = vmatprep.subr.bf16.mxu0 0
    %769 = vmatpush1.bf16.msra.mxu0 %v576
    %770 = vmatprep.subr.bf16.mxu0 0
    %771 = vmatpush1.bf16.msra.mxu0 %v577
    %772 = vmatprep.mubr.bf16.mxu0 %v263
    %773 = vmatmul.mubr.bf16.gmra.mrb[0].mxu0 %v262
    %v774 = vpop.f32.mrb[0].mxu0
    %v775 = vadd.f32 %v734, %v774
    %v776 = vpop.f32.mrb[0].mxu0
    %v777 = vpop.f32.mrb[0].mxu0
    %v778 = vadd.f32 %v737, %v777
    %v779 = vpop.f32.mrb[0].mxu0
    %780 = vdwg.mxu0
    %781 = vmatprep.subr.bf16.mxu0 0
    %782 = vmatpush1.bf16.msra.mxu0 %v578
    %783 = vmatprep.subr.bf16.mxu0 0
    %784 = vmatpush1.bf16.msra.mxu0 %v579
    %785 = vmatprep.subr.bf16.mxu0 0
    %786 = vmatpush1.bf16.msra.mxu0 %v580
    %787 = vmatprep.subr.bf16.mxu0 0
    %788 = vmatpush1.bf16.msra.mxu0 %v581
    %789 = vmatprep.subr.bf16.mxu0 0
    %790 = vmatpush1.bf16.msra.mxu0 %v582
    %791 = vmatprep.subr.bf16.mxu0 0
    %792 = vmatpush1.bf16.msra.mxu0 %v583
    %793 = vmatprep.subr.bf16.mxu0 0
    %794 = vmatpush1.bf16.msra.mxu0 %v584
    %795 = vmatprep.subr.bf16.mxu0 0
    %796 = vmatpush1.bf16.msra.mxu0 %v585
    %797 = vmatprep.subr.bf16.mxu0 0
    %798 = vmatpush1.bf16.msra.mxu0 %v586
    %799 = vmatprep.subr.bf16.mxu0 0
    %800 = vmatpush1.bf16.msra.mxu0 %v587
    %801 = vmatprep.subr.bf16.mxu0 0
    %802 = vmatpush1.bf16.msra.mxu0 %v588
    %803 = vmatprep.subr.bf16.mxu0 0
    %804 = vmatpush1.bf16.msra.mxu0 %v589
    %805 = vmatprep.subr.bf16.mxu0 0
    %806 = vmatpush1.bf16.msra.mxu0 %v590
    %807 = vmatprep.subr.bf16.mxu0 0
    %808 = vmatpush1.bf16.msra.mxu0 %v591
    %809 = vmatprep.subr.bf16.mxu0 0
    %810 = vmatpush1.bf16.msra.mxu0 %v592
    %811 = vmatprep.subr.bf16.mxu0 0
    %812 = vmatpush1.bf16.msra.mxu0 %v593
    %813 = vmatprep.mubr.bf16.mxu0 %v265
    %814 = vmatmul.mubr.bf16.gmra.mrb[0].mxu0 %v264
    %v815 = vpop.f32.mrb[0].mxu0
    %v816 = vadd.f32 %v775, %v815
    %v817 = vpop.f32.mrb[0].mxu0
    %v818 = vpop.f32.mrb[0].mxu0
    %v819 = vadd.f32 %v778, %v818
    %v820 = vpop.f32.mrb[0].mxu0
    %821 = vdwg.mxu0
    %v822 = vld [vmem:[%s1] sm:$0xf]
    %v823 = vld [vmem:[%s1 + $0x4] sm:$0xf]
    %v824 = vunpack.c.l.bf16 %v822
    %v825 = vunpack.c.l.bf16 %v823
    %827 = vset.pattern.permute.xlu0 0
    %828 = vperm.xlu0 %827, %v89
    %v829 = vpop.permute.xlu0 %828
    %832 = vset.pattern.permute.xlu0 0
    %833 = vperm.xlu0 %832, %v90
    %v834 = vpop.permute.xlu0 %833
    %836 = vset.pattern.permute.xlu0 1
    %837 = vperm.xlu0 %836, %v89
    %v838 = vpop.permute.xlu0 %837
    %840 = vset.pattern.permute.xlu0 1
    %841 = vperm.xlu0 %840, %v90
    %v842 = vpop.permute.xlu0 %841
    %v844 = vmul.f32 %v829, %v824
    %v845 = vmul.f32 %v834, %v825
    %v846 = vmul.f32 %v838, %v816
    %v847 = vmul.f32 %v842, %v819
    %v848 = vsub.f32 %v844, %v846
    %v849 = vsub.f32 %v845, %v847
    %v850 = vmul.f32 %v829, %v816
    %v851 = vmul.f32 %v834, %v819
    %v852 = vmul.f32 %v838, %v824
    %v853 = vmul.f32 %v842, %v825
    %v854 = vadd.f32 %v850, %v852
    %v855 = vadd.f32 %v851, %v853
    %v856 = vpack.c.bf16 %v855, %v854
    %v857 = vld [vmem:[#allocation7] sm:$0xf]
    %v858 = vld [vmem:[#allocation7 + $0x4] sm:$0xf]
    %v859 = vld [vmem:[#allocation7 + $0x8] sm:$0xf]
    %v860 = vld [vmem:[#allocation7 + $0xc] sm:$0xf]
    %v861 = vld [vmem:[#allocation7 + $0x10] sm:$0xf]
    %v862 = vld [vmem:[#allocation7 + $0x14] sm:$0xf]
    %v863 = vld [vmem:[#allocation7 + $0x18] sm:$0xf]
    %v864 = vld [vmem:[#allocation7 + $0x1c] sm:$0xf]
    %v865 = vld [vmem:[#allocation7 + $0x20] sm:$0xf]
    %v866 = vld [vmem:[#allocation7 + $0x24] sm:$0xf]
    %v867 = vld [vmem:[#allocation7 + $0x28] sm:$0xf]
    %v868 = vld [vmem:[#allocation7 + $0x2c] sm:$0xf]
    %v869 = vld [vmem:[#allocation7 + $0x30] sm:$0xf]
    %v870 = vld [vmem:[#allocation7 + $0x34] sm:$0xf]
    %v871 = vld [vmem:[#allocation7 + $0x38] sm:$0xf]
    %v872 = vld [vmem:[#allocation7 + $0x3c] sm:$0xf]
    %v873 = vld [vmem:[%s2] sm:$0xf]
    %v874 = vld [vmem:[%s2 + $0x4] sm:$0xf]
    %v875 = vunpack.c.l.bf16 %v873
    %v876 = vunpack.c.l.bf16 %v874
    %v893 = vunpack.c.l.b16 %v857
    %v894 = vunpack.c.l.b16 %v858
    %v895 = vunpack.c.l.b16 %v859
    %v896 = vunpack.c.l.b16 %v860
    %v897 = vunpack.c.l.b16 %v861
    %v898 = vunpack.c.l.b16 %v862
    %v899 = vunpack.c.l.b16 %v863
    %v900 = vunpack.c.l.b16 %v864
    %v901 = vunpack.c.l.b16 %v865
    %v902 = vunpack.c.l.b16 %v866
    %v903 = vunpack.c.l.b16 %v867
    %v904 = vunpack.c.l.b16 %v868
    %v905 = vunpack.c.l.b16 %v869
    %v906 = vunpack.c.l.b16 %v870
    %v907 = vunpack.c.l.b16 %v871
    %v908 = vunpack.c.l.b16 %v872
    %v909 = vpack.c.b16 %v894, %v893
    %v910 = vpack.c.b16 %v896, %v895
    %v911 = vpack.c.b16 %v898, %v897
    %v912 = vpack.c.b16 %v900, %v899
    %v913 = vpack.c.b16 %v902, %v901
    %v914 = vpack.c.b16 %v904, %v903
    %v915 = vpack.c.b16 %v906, %v905
    %v916 = vpack.c.b16 %v908, %v907
    %925 = vmatprep.subr.bf16.mxu0 0
    %926 = vmatpush1.bf16.msra.mxu0 %v909
    %927 = vmatprep.subr.bf16.mxu0 0
    %928 = vmatpush1.bf16.msra.mxu0 %v910
    %929 = vmatprep.subr.bf16.mxu0 0
    %930 = vmatpush1.bf16.msra.mxu0 %v911
    %931 = vmatprep.subr.bf16.mxu0 0
    %932 = vmatpush1.bf16.msra.mxu0 %v912
    %933 = vmatprep.subr.bf16.mxu0 0
    %934 = vmatpush1.bf16.msra.mxu0 %v913
    %935 = vmatprep.subr.bf16.mxu0 0
    %936 = vmatpush1.bf16.msra.mxu0 %v914
    %937 = vmatprep.subr.bf16.mxu0 0
    %938 = vmatpush1.bf16.msra.mxu0 %v915
    %939 = vmatprep.subr.bf16.mxu0 0
    %940 = vmatpush1.bf16.msra.mxu0 %v916
    %941 = vmatprep.subr.bf16.mxu0 0
    %942 = vmatpush1.bf16.msra.mxu0 0
    %943 = vmatprep.subr.bf16.mxu0 0
    %944 = vmatpush1.bf16.msra.mxu0 0
    %945 = vmatprep.subr.bf16.mxu0 0
    %946 = vmatpush1.bf16.msra.mxu0 0
    %947 = vmatprep.subr.bf16.mxu0 0
    %948 = vmatpush1.bf16.msra.mxu0 0
    %949 = vmatprep.subr.bf16.mxu0 0
    %950 = vmatpush1.bf16.msra.mxu0 0
    %951 = vmatprep.subr.bf16.mxu0 0
    %952 = vmatpush1.bf16.msra.mxu0 0
    %953 = vmatprep.subr.bf16.mxu0 0
    %954 = vmatpush1.bf16.msra.mxu0 0
    %955 = vmatprep.subr.bf16.mxu0 0
    %956 = vmatpush1.bf16.msra.mxu0 0
    %957 = vmatprep.mubr.bf16.mxu0 0
    %958 = vmatmul.mubr.bf16.gmra.mrb[0].mxu0 %v856
    %v959 = vpop.f32.mrb[0].mxu0
    %v960 = vadd.f32 %v875, %v959
    %v961 = vpop.f32.mrb[0].mxu0
    %v962 = vpop.f32.mrb[0].mxu0
    %v963 = vadd.f32 %v876, %v962
    %v964 = vpop.f32.mrb[0].mxu0
    %965 = vdwg.mxu0
    %v966 = vxor.u32 %v960, 2147483648
    %v967 = vxor.u32 %v963, 2147483648
    %v968 = vmul.f32 %v966, 1.442695
    %v969 = vpow.pop %v968
    %v970 = vmul.f32 %v967, 1.442695
    %v971 = vpow.pop %v970
    %v972 = vadd.f32 %v969, 1.0
    %v973 = vadd.f32 %v971, 1.0
    %v974 = vrcp.pop %v972
    %v975 = vmul.f32 1.0, %v974
    %v976 = vrcp.pop %v973
    %v977 = vmul.f32 1.0, %v976
    %v978 = vmul.f32 %v960, %v975
    %v979 = vmul.f32 %v963, %v977
    %v980 = vpack.c.bf16 %v979, %v978
    %v981 = vld [vmem:[#allocation8] sm:$0xf]
    %v982 = vld [vmem:[#allocation8 + $0x4] sm:$0xf]
    %v983 = vld [vmem:[#allocation8 + $0x8] sm:$0xf]
    %v984 = vld [vmem:[#allocation8 + $0xc] sm:$0xf]
    %v985 = vld [vmem:[#allocation8 + $0x10] sm:$0xf]
    %v986 = vld [vmem:[#allocation8 + $0x14] sm:$0xf]
    %v987 = vld [vmem:[#allocation8 + $0x18] sm:$0xf]
    %v988 = vld [vmem:[#allocation8 + $0x1c] sm:$0xf]
    %v989 = vld [vmem:[#allocation8 + $0x20] sm:$0xf]
    %v990 = vld [vmem:[#allocation8 + $0x24] sm:$0xf]
    %v991 = vld [vmem:[#allocation8 + $0x28] sm:$0xf]
    %v992 = vld [vmem:[#allocation8 + $0x2c] sm:$0xf]
    %v993 = vld [vmem:[#allocation8 + $0x30] sm:$0xf]
    %v994 = vld [vmem:[#allocation8 + $0x34] sm:$0xf]
    %v995 = vld [vmem:[#allocation8 + $0x38] sm:$0xf]
    %v996 = vld [vmem:[#allocation8 + $0x3c] sm:$0xf]
    %v997 = vld [vmem:[%s8] sm:$0x1]
    %v999 = vlaneseq
    %v1000 = vshrl.u32 %v999, 7
    %v1001 = vsub.s32 0, %v1000
    %v1002 = vrot.slane %v997, %v1001
    %v1020 = vunpack.c.l.b16 %v981
    %v1021 = vunpack.c.l.b16 %v982
    %v1022 = vunpack.c.l.b16 %v983
    %v1023 = vunpack.c.l.b16 %v984
    %v1024 = vunpack.c.l.b16 %v985
    %v1025 = vunpack.c.l.b16 %v986
    %v1026 = vunpack.c.l.b16 %v987
    %v1027 = vunpack.c.l.b16 %v988
    %v1028 = vunpack.c.l.b16 %v989
    %v1029 = vunpack.c.l.b16 %v990
    %v1030 = vunpack.c.l.b16 %v991
    %v1031 = vunpack.c.l.b16 %v992
    %v1032 = vunpack.c.l.b16 %v993
    %v1033 = vunpack.c.l.b16 %v994
    %v1034 = vunpack.c.l.b16 %v995
    %v1035 = vunpack.c.l.b16 %v996
    %v1036 = vpack.c.b16 %v1021, %v1020
    %v1037 = vpack.c.b16 %v1023, %v1022
    %v1038 = vpack.c.b16 %v1025, %v1024
    %v1039 = vpack.c.b16 %v1027, %v1026
    %v1040 = vpack.c.b16 %v1029, %v1028
    %v1041 = vpack.c.b16 %v1031, %v1030
    %v1042 = vpack.c.b16 %v1033, %v1032
    %v1043 = vpack.c.b16 %v1035, %v1034
    %1052 = vmatprep.subr.bf16.mxu0 0
    %1053 = vmatpush1.bf16.msra.mxu0 %v1036
    %1054 = vmatprep.subr.bf16.mxu0 0
    %1055 = vmatpush1.bf16.msra.mxu0 %v1037
    %1056 = vmatprep.subr.bf16.mxu0 0
    %1057 = vmatpush1.bf16.msra.mxu0 %v1038
    %1058 = vmatprep.subr.bf16.mxu0 0
    %1059 = vmatpush1.bf16.msra.mxu0 %v1039
    %1060 = vmatprep.subr.bf16.mxu0 0
    %1061 = vmatpush1.bf16.msra.mxu0 %v1040
    %1062 = vmatprep.subr.bf16.mxu0 0
    %1063 = vmatpush1.bf16.msra.mxu0 %v1041
    %1064 = vmatprep.subr.bf16.mxu0 0
    %1065 = vmatpush1.bf16.msra.mxu0 %v1042
    %1066 = vmatprep.subr.bf16.mxu0 0
    %1067 = vmatpush1.bf16.msra.mxu0 %v1043
    %1068 = vmatprep.subr.bf16.mxu0 0
    %1069 = vmatpush1.bf16.msra.mxu0 0
    %1070 = vmatprep.subr.bf16.mxu0 0
    %1071 = vmatpush1.bf16.msra.mxu0 0
    %1072 = vmatprep.subr.bf16.mxu0 0
    %1073 = vmatpush1.bf16.msra.mxu0 0
    %1074 = vmatprep.subr.bf16.mxu0 0
    %1075 = vmatpush1.bf16.msra.mxu0 0
    %1076 = vmatprep.subr.bf16.mxu0 0
    %1077 = vmatpush1.bf16.msra.mxu0 0
    %1078 = vmatprep.subr.bf16.mxu0 0
    %1079 = vmatpush1.bf16.msra.mxu0 0
    %1080 = vmatprep.subr.bf16.mxu0 0
    %1081 = vmatpush1.bf16.msra.mxu0 0
    %1082 = vmatprep.subr.bf16.mxu0 0
    %1083 = vmatpush1.bf16.msra.mxu0 0
    %1084 = vmatprep.mubr.bf16.mxu0 0
    %1085 = vmatmul.mubr.bf16.gmra.mrb[0].mxu0 %v980
    %v1086 = vpop.f32.mrb[0].mxu0
    %v1087 = vadd.f32 %v1002, %v1086
    %v1088 = vpop.f32.mrb[0].mxu0
    %v1089 = vpop.f32.mrb[0].mxu0
    %v1090 = vadd.f32 %v1002, %v1089
    %v1091 = vpop.f32.mrb[0].mxu0
    %1092 = vdwg.mxu0
    %v1093 = vsub.f32 %v1087, %v848
    %v1094 = vsub.f32 %v1090, %v849
    %v1095 = vmul.f32 %v1093, %v1093
    %v1096 = vmul.f32 %v1094, %v1094
    %1097 = vadd.xlane.f32.xlu0 %v1095
    %v1098 = vpop.xlane.xlu0 %1097
    %1099 = vadd.xlane.f32.xlu0 %v1096
    %v1100 = vpop.xlane.xlu0 %1099
    %v1101 = vmul.f32 %v1098, 0.015625
    %v1102 = vmul.f32 %v1100, 0.015625
    %v1103 = vmul.f32 %v1101, %v89
    %v1104 = vmul.f32 %v1102, %v90
    %vm1105 = vcmask 23568
    %v1106 = vsel %vm1105, %v1103, 0.0
    %v1107 = vsel %vm1105, %v1104, 0.0
    %v1108 = vadd.f32 %v1106, %v1107
    %v1109 = vrot.slane %v1108, 4
    %v1110 = vadd.f32 %v1108, %v1109
    %v1111 = vrot.slane %v1110, 2
    %v1112 = vadd.f32 %v1110, %v1111
    %v1113 = vrot.slane %v1112, 1
    %v1114 = vadd.f32 %v1112, %v1113
    %1116 = vset.pattern.permute.xlu0 2
    %1117 = vperm.xlu0 %1116, %v1114
    %v1118 = vpop.permute.xlu0 %1117
    %1120 = vst [vmem:[#allocation10] sm:$0xff] %v1118
    // Predicated region
    $region54: #{tpu_custom_call.1} parent=1 // pred_check
      _
    $region55: #{tpu_custom_call.1} parent=1 // pred_check_branch
      %1122 = sbr.rel (0) target = $region57
    $region56: #{tpu_custom_call.1} parent=1 // pred_region
      %s1124 = ssub.s32 128, 128
      %1125 = vsyncadd [#allocation4], %s1124
      %s1127 = sshll.u32 [#allocation10], 4
      %s1128 = int_to_ptr.vmem [resolvable:$true] %s1127
      %1130 = dma.vmem_to_hbm [thread:$0]  %s1128, 128, %s9, [#allocation4]
    $region57: #{tpu_custom_call.1} parent=1 // pred_fallthru
      _
    // Predicated region
    $region58: #{tpu_custom_call.1} parent=1 // pred_check
      _
    $region59: #{tpu_custom_call.1} parent=1 // pred_check_branch
      %1132 = sbr.rel (0) target = $region61
    $region60: #{tpu_custom_call.1} parent=1 // pred_region
      %1133 = dma.done [#allocation4], 128
    $region61: #{tpu_custom_call.1} parent=1 // pred_fallthru
      _
    %1134 = vsyncpa [#allocation3], 1
    %1135 = vsyncpa [#allocation6], 1
    %1136 = vsyncpa [#allocation9], 1
    %1137 = vsyncpa [#allocation4], 1

</llo_original>
